<compile_context>
chip_gen: v7x
topology: tpu7x:2x2x1
jax: 0.10.0
libtpu: 0.0.40
codegen_flags: <defaults>
</compile_context>

<pallas_src>
import functools

import jax
import jax.numpy as jnp
from jax.experimental import pallas as pl
from jax.experimental.pallas import tpu as pltpu

LANE = 128  # TPU lane width; pad all matrix dims to a multiple of this.


def _round_up(x, m):
    return ((x + m - 1) // m) * m


def _pad2d(a, rows, cols):
    r, c = a.shape
    return jnp.pad(a, ((0, rows - r), (0, cols - c)))


# ---------------------------------------------------------------------------
# Fused Pallas kernel: all 4 GraphConvolution layers in one body.
#   h1  = relu(adj @ (x  @ W1))
#   enc =       adj @ (h1 @ W2)
#   d1  = relu(adj @ (enc @ W3))
#   dec =       adj @ (d1 @ W4)
# All 8 matmuls run on the MXU with f32 accumulation; intermediates stay in
# registers / VMEM (never written back to HBM).
# ---------------------------------------------------------------------------
def _gcnae_fused_kernel(adj_ref, x_ref, w1_ref, w2_ref, w3_ref, w4_ref,
                        dec_ref, enc_ref):
    adj = adj_ref[...]                       # (Np, Np), MXU compute dtype
    mxu_dtype = adj.dtype

    def gc_layer(h, w, relu):
        # support = H @ W  (flop-optimal order), f32 accumulation on the MXU
        support = jnp.dot(h, w, preferred_element_type=jnp.float32)
        out = jnp.dot(adj, support.astype(mxu_dtype),
                      preferred_element_type=jnp.float32)
        if relu:
            # keep elementwise math in f32 (v5e has no bf16 VPU)
            out = jnp.maximum(out, 0.0)
        return out

    h1 = gc_layer(x_ref[...], w1_ref[...], relu=True)
    enc = gc_layer(h1.astype(mxu_dtype), w2_ref[...], relu=False)
    d1 = gc_layer(enc.astype(mxu_dtype), w3_ref[...], relu=True)
    dec = gc_layer(d1.astype(mxu_dtype), w4_ref[...], relu=False)

    dec_ref[...] = dec        # lane-dense f32 stores (padded last dims = 128k)
    enc_ref[...] = enc


# ---------------------------------------------------------------------------
# Wrapper: pad to lane-dense shapes, cast MXU operands to bf16, launch once.
# ---------------------------------------------------------------------------
def gcnae_forward(x, adj, params, *, compute_dtype=jnp.bfloat16):
    N, F_in = x.shape
    H1 = params["enc_w1"].shape[1]
    H2 = params["enc_w2"].shape[1]

    Np = _round_up(N, LANE)
    Fp = _round_up(F_in, LANE)
    H1p = _round_up(H1, LANE)
    H2p = _round_up(H2, LANE)

    adj_p = _pad2d(adj, Np, Np).astype(compute_dtype)
    x_p = _pad2d(x, Np, Fp).astype(compute_dtype)
    w1_p = _pad2d(params["enc_w1"], Fp, H1p).astype(compute_dtype)
    w2_p = _pad2d(params["enc_w2"], H1p, H2p).astype(compute_dtype)
    w3_p = _pad2d(params["dec_w1"], H2p, H1p).astype(compute_dtype)
    w4_p = _pad2d(params["dec_w2"], H1p, Fp).astype(compute_dtype)

    itemsize = jnp.dtype(compute_dtype).itemsize
    flops = 2 * Np * (Fp * H1p + Np * H1p      # layer 1
                      + H1p * H2p + Np * H2p   # layer 2
                      + H2p * H1p + Np * H1p   # layer 3
                      + H1p * Fp + Np * Fp)    # layer 4
    bytes_in = (adj_p.size + x_p.size + w1_p.size + w2_p.size
                + w3_p.size + w4_p.size) * itemsize
    bytes_out = (Np * Fp + Np * H2p) * 4

    def full_spec(shape):
        return pl.BlockSpec(shape, lambda i: (0, 0))

    dec_p, enc_p = pl.pallas_call(
        _gcnae_fused_kernel,
        out_shape=(
            jax.ShapeDtypeStruct((Np, Fp), jnp.float32),   # dec (padded)
            jax.ShapeDtypeStruct((Np, H2p), jnp.float32),  # enc (padded)
        ),
        grid=(1,),
        in_specs=[
            full_spec((Np, Np)),    # adj
            full_spec((Np, Fp)),    # x
            full_spec((Fp, H1p)),   # enc W1
            full_spec((H1p, H2p)),  # enc W2
            full_spec((H2p, H1p)),  # dec W1
            full_spec((H1p, Fp)),   # dec W2
        ],
        out_specs=(
            full_spec((Np, Fp)),
            full_spec((Np, H2p)),
        ),
        compiler_params=pltpu.CompilerParams(
            dimension_semantics=("arbitrary",),
        ),
        cost_estimate=pl.CostEstimate(
            flops=flops, transcendentals=0,
            bytes_accessed=bytes_in + bytes_out),
    )(adj_p, x_p, w1_p, w2_p, w3_p, w4_p)

    # slice the valid (unpadded) region back out
    return dec_p[:N, :F_in], enc_p[:N, :H2]


# ---------------------------------------------------------------------------
# Deterministic parameter init (glorot-uniform, like reset_parameters in the
# reference GraphConvolution).
# ---------------------------------------------------------------------------
def glorot(key, fan_in, fan_out):
    limit = (6.0 / (fan_in + fan_out)) ** 0.5
    return jax.random.uniform(
        key, (fan_in, fan_out), dtype=jnp.float32, minval=-limit, maxval=limit
    )


def init_params(key, input_feat_dim, hidden_dim1, hidden_dim2):
    k1, k2, k3, k4 = jax.random.split(key, 4)
    return {
        "enc_w1": glorot(k1, input_feat_dim, hidden_dim1),
        "enc_w2": glorot(k2, hidden_dim1, hidden_dim2),
        "dec_w1": glorot(k3, hidden_dim2, hidden_dim1),
        "dec_w2": glorot(k4, hidden_dim1, input_feat_dim),
    }


def build_norm_adj(key, n):
    """Random symmetric graph, self-loops, symmetric normalization."""
    a = (jax.random.uniform(key, (n, n)) < 0.2).astype(jnp.float32)
    a = jnp.maximum(a, a.T)
    a = a + jnp.eye(n, dtype=jnp.float32)
    deg = jnp.sum(a, axis=1)
    d_inv_sqrt = 1.0 / jnp.sqrt(deg)
    return a * d_inv_sqrt[:, None] * d_inv_sqrt[None, :]


if __name__ == "__main__":
    # small shapes consistent with the module
    N = 64               # number of graph nodes
    input_feat_dim = 32
    hidden_dim1 = 16
    hidden_dim2 = 8

    key = jax.random.PRNGKey(0)
    kx, kadj, kp = jax.random.split(key, 3)

    x = jax.random.normal(kx, (N, input_feat_dim), dtype=jnp.float32)
    adj = build_norm_adj(kadj, N)
    params = init_params(kp, input_feat_dim, hidden_dim1, hidden_dim2)

    fwd = jax.jit(functools.partial(gcnae_forward))
    dec, enc = fwd(x, adj, params)
    dec = jax.block_until_ready(dec)
    enc = jax.block_until_ready(enc)

    # Pure-JAX references of the same math.
    def ref_forward(x, adj, params, dtype):
        adj_c = adj.astype(dtype)

        def layer(h, w, relu):
            s = jnp.dot(h.astype(dtype), w.astype(dtype),
                        preferred_element_type=jnp.float32)
            o = jnp.dot(adj_c, s.astype(dtype),
                        preferred_element_type=jnp.float32)
            return jnp.maximum(o, 0.0) if relu else o

        h1 = layer(x, params["enc_w1"], True)
        r_enc = layer(h1, params["enc_w2"], False)
        d1 = layer(r_enc, params["dec_w1"], True)
        r_dec = layer(d1, params["dec_w2"], False)
        return r_dec, r_enc

    # matched precision (bf16 MXU operands, f32 accumulation) -> tight check
    rdec_b, renc_b = ref_forward(x, adj, params, jnp.bfloat16)
    # full f32 reference -> loose sanity check of overall semantics
    rdec_f, renc_f = ref_forward(x, adj, params, jnp.float32)

    assert dec.shape == (N, input_feat_dim) and enc.shape == (N, hidden_dim2)
    assert jnp.allclose(enc, renc_b, atol=1e-3, rtol=1e-3)
    assert jnp.allclose(dec, rdec_b, atol=1e-3, rtol=1e-3)
    assert jnp.allclose(enc, renc_f, atol=1e-1, rtol=1e-1)
    assert jnp.allclose(dec, rdec_f, atol=1e-1, rtol=1e-1)

    print("KERNEL_OK")
</pallas_src>

<mosaic_0001>
module attributes {stable_mosaic.version = 11 : i64} {
  func.func @_gcnae_fused_kernel(%arg0: i32, %arg1: memref<128x128xbf16, #tpu.memory_space<vmem>>, %arg2: memref<128x128xbf16, #tpu.memory_space<vmem>>, %arg3: memref<128x128xbf16, #tpu.memory_space<vmem>>, %arg4: memref<128x128xbf16, #tpu.memory_space<vmem>>, %arg5: memref<128x128xbf16, #tpu.memory_space<vmem>>, %arg6: memref<128x128xbf16, #tpu.memory_space<vmem>>, %arg7: memref<128x128xf32, #tpu.memory_space<vmem>>, %arg8: memref<128x128xf32, #tpu.memory_space<vmem>>) attributes {dimension_semantics = [#tpu.dimension_semantics<arbitrary>], iteration_bounds = array<i64: 1>, scalar_prefetch = 0 : i64, scratch_operands = 0 : i64, tpu.core_type = #tpu.core_type<tc>, window_params = [{pipeline_mode = #tpu.pipeline_mode<synchronous>, transform_indices = @transform_0, window_bounds = array<i64: 128, 128>}, {pipeline_mode = #tpu.pipeline_mode<synchronous>, transform_indices = @transform_1, window_bounds = array<i64: 128, 128>}, {pipeline_mode = #tpu.pipeline_mode<synchronous>, transform_indices = @transform_2, window_bounds = array<i64: 128, 128>}, {pipeline_mode = #tpu.pipeline_mode<synchronous>, transform_indices = @transform_3, window_bounds = array<i64: 128, 128>}, {pipeline_mode = #tpu.pipeline_mode<synchronous>, transform_indices = @transform_4, window_bounds = array<i64: 128, 128>}, {pipeline_mode = #tpu.pipeline_mode<synchronous>, transform_indices = @transform_5, window_bounds = array<i64: 128, 128>}, {pipeline_mode = #tpu.pipeline_mode<synchronous>, transform_indices = @transform_6, window_bounds = array<i64: 128, 128>}, {pipeline_mode = #tpu.pipeline_mode<synchronous>, transform_indices = @transform_7, window_bounds = array<i64: 128, 128>}]} {
    %c0 = arith.constant 0 : index
    %c0_0 = arith.constant 0 : index
    %0 = vector.load %arg1[%c0, %c0_0] : memref<128x128xbf16, #tpu.memory_space<vmem>>, vector<128x128xbf16>
    %c0_1 = arith.constant 0 : index
    %c0_2 = arith.constant 0 : index
    %1 = vector.load %arg2[%c0_1, %c0_2] : memref<128x128xbf16, #tpu.memory_space<vmem>>, vector<128x128xbf16>
    %c0_3 = arith.constant 0 : index
    %c0_4 = arith.constant 0 : index
    %2 = vector.load %arg3[%c0_3, %c0_4] : memref<128x128xbf16, #tpu.memory_space<vmem>>, vector<128x128xbf16>
    %cst = arith.constant dense<0.000000e+00> : vector<128x128xf32>
    %3 = tpu.matmul %1, %2, %cst {dimension_numbers = #tpu.dot_dimension_numbers<[1], [0], [0], [1], [0, 0, 1, 1], [], []>} : vector<128x128xbf16>, vector<128x128xbf16>, vector<128x128xf32> -> vector<128x128xf32>
    %4 = arith.truncf %3 : vector<128x128xf32> to vector<128x128xbf16>
    %cst_5 = arith.constant dense<0.000000e+00> : vector<128x128xf32>
    %5 = tpu.matmul %0, %4, %cst_5 {dimension_numbers = #tpu.dot_dimension_numbers<[1], [0], [0], [1], [0, 0, 1, 1], [], []>} : vector<128x128xbf16>, vector<128x128xbf16>, vector<128x128xf32> -> vector<128x128xf32>
    %cst_6 = arith.constant 0.000000e+00 : f32
    %6 = vector.broadcast %cst_6 : f32 to vector<128x128xf32>
    %7 = arith.maximumf %5, %6 : vector<128x128xf32>
    %8 = arith.truncf %7 : vector<128x128xf32> to vector<128x128xbf16>
    %c0_7 = arith.constant 0 : index
    %c0_8 = arith.constant 0 : index
    %9 = vector.load %arg4[%c0_7, %c0_8] : memref<128x128xbf16, #tpu.memory_space<vmem>>, vector<128x128xbf16>
    %cst_9 = arith.constant dense<0.000000e+00> : vector<128x128xf32>
    %10 = tpu.matmul %8, %9, %cst_9 {dimension_numbers = #tpu.dot_dimension_numbers<[1], [0], [0], [1], [0, 0, 1, 1], [], []>} : vector<128x128xbf16>, vector<128x128xbf16>, vector<128x128xf32> -> vector<128x128xf32>
    %11 = arith.truncf %10 : vector<128x128xf32> to vector<128x128xbf16>
    %cst_10 = arith.constant dense<0.000000e+00> : vector<128x128xf32>
    %12 = tpu.matmul %0, %11, %cst_10 {dimension_numbers = #tpu.dot_dimension_numbers<[1], [0], [0], [1], [0, 0, 1, 1], [], []>} : vector<128x128xbf16>, vector<128x128xbf16>, vector<128x128xf32> -> vector<128x128xf32>
    %13 = arith.truncf %12 : vector<128x128xf32> to vector<128x128xbf16>
    %c0_11 = arith.constant 0 : index
    %c0_12 = arith.constant 0 : index
    %14 = vector.load %arg5[%c0_11, %c0_12] : memref<128x128xbf16, #tpu.memory_space<vmem>>, vector<128x128xbf16>
    %cst_13 = arith.constant dense<0.000000e+00> : vector<128x128xf32>
    %15 = tpu.matmul %13, %14, %cst_13 {dimension_numbers = #tpu.dot_dimension_numbers<[1], [0], [0], [1], [0, 0, 1, 1], [], []>} : vector<128x128xbf16>, vector<128x128xbf16>, vector<128x128xf32> -> vector<128x128xf32>
    %16 = arith.truncf %15 : vector<128x128xf32> to vector<128x128xbf16>
    %cst_14 = arith.constant dense<0.000000e+00> : vector<128x128xf32>
    %17 = tpu.matmul %0, %16, %cst_14 {dimension_numbers = #tpu.dot_dimension_numbers<[1], [0], [0], [1], [0, 0, 1, 1], [], []>} : vector<128x128xbf16>, vector<128x128xbf16>, vector<128x128xf32> -> vector<128x128xf32>
    %cst_15 = arith.constant 0.000000e+00 : f32
    %18 = vector.broadcast %cst_15 : f32 to vector<128x128xf32>
    %19 = arith.maximumf %17, %18 : vector<128x128xf32>
    %20 = arith.truncf %19 : vector<128x128xf32> to vector<128x128xbf16>
    %c0_16 = arith.constant 0 : index
    %c0_17 = arith.constant 0 : index
    %21 = vector.load %arg6[%c0_16, %c0_17] : memref<128x128xbf16, #tpu.memory_space<vmem>>, vector<128x128xbf16>
    %cst_18 = arith.constant dense<0.000000e+00> : vector<128x128xf32>
    %22 = tpu.matmul %20, %21, %cst_18 {dimension_numbers = #tpu.dot_dimension_numbers<[1], [0], [0], [1], [0, 0, 1, 1], [], []>} : vector<128x128xbf16>, vector<128x128xbf16>, vector<128x128xf32> -> vector<128x128xf32>
    %23 = arith.truncf %22 : vector<128x128xf32> to vector<128x128xbf16>
    %cst_19 = arith.constant dense<0.000000e+00> : vector<128x128xf32>
    %24 = tpu.matmul %0, %23, %cst_19 {dimension_numbers = #tpu.dot_dimension_numbers<[1], [0], [0], [1], [0, 0, 1, 1], [], []>} : vector<128x128xbf16>, vector<128x128xbf16>, vector<128x128xf32> -> vector<128x128xf32>
    %c0_20 = arith.constant 0 : index
    %c0_21 = arith.constant 0 : index
    %25 = vector.load %arg7[%c0_20, %c0_21] : memref<128x128xf32, #tpu.memory_space<vmem>>, vector<128x128xf32>
    tpu.vector_store %arg7[%c0_20, %c0_21], %24 {strides = array<i32>} : memref<128x128xf32, #tpu.memory_space<vmem>>, vector<128x128xf32>,
    %c0_22 = arith.constant 0 : index
    %c0_23 = arith.constant 0 : index
    %26 = vector.load %arg8[%c0_22, %c0_23] : memref<128x128xf32, #tpu.memory_space<vmem>>, vector<128x128xf32>
    tpu.vector_store %arg8[%c0_22, %c0_23], %12 {strides = array<i32>} : memref<128x128xf32, #tpu.memory_space<vmem>>, vector<128x128xf32>,
    return
  }
  func.func @transform_0(%arg0: i32) -> (i32, i32) {
    %c0_i32 = arith.constant 0 : i32
    %c0_i32_0 = arith.constant 0 : i32
    %c0_i32_1 = arith.constant 0 : i32
    return %c0_i32, %c0_i32_0 : i32, i32
  }
  func.func @transform_1(%arg0: i32) -> (i32, i32) {
    %c0_i32 = arith.constant 0 : i32
    %c0_i32_0 = arith.constant 0 : i32
    %c0_i32_1 = arith.constant 0 : i32
    return %c0_i32, %c0_i32_0 : i32, i32
  }
  func.func @transform_2(%arg0: i32) -> (i32, i32) {
    %c0_i32 = arith.constant 0 : i32
    %c0_i32_0 = arith.constant 0 : i32
    %c0_i32_1 = arith.constant 0 : i32
    return %c0_i32, %c0_i32_0 : i32, i32
  }
  func.func @transform_3(%arg0: i32) -> (i32, i32) {
    %c0_i32 = arith.constant 0 : i32
    %c0_i32_0 = arith.constant 0 : i32
    %c0_i32_1 = arith.constant 0 : i32
    return %c0_i32, %c0_i32_0 : i32, i32
  }
  func.func @transform_4(%arg0: i32) -> (i32, i32) {
    %c0_i32 = arith.constant 0 : i32
    %c0_i32_0 = arith.constant 0 : i32
    %c0_i32_1 = arith.constant 0 : i32
    return %c0_i32, %c0_i32_0 : i32, i32
  }
  func.func @transform_5(%arg0: i32) -> (i32, i32) {
    %c0_i32 = arith.constant 0 : i32
    %c0_i32_0 = arith.constant 0 : i32
    %c0_i32_1 = arith.constant 0 : i32
    return %c0_i32, %c0_i32_0 : i32, i32
  }
  func.func @transform_6(%arg0: i32) -> (i32, i32) {
    %c0_i32 = arith.constant 0 : i32
    %c0_i32_0 = arith.constant 0 : i32
    %c0_i32_1 = arith.constant 0 : i32
    return %c0_i32, %c0_i32_0 : i32, i32
  }
  func.func @transform_7(%arg0: i32) -> (i32, i32) {
    %c0_i32 = arith.constant 0 : i32
    %c0_i32_0 = arith.constant 0 : i32
    %c0_i32_1 = arith.constant 0 : i32
    return %c0_i32, %c0_i32_0 : i32, i32
  }
}

</mosaic_0001>

<llo_original>
// kernel: gcnae_forward.1
$region0: #{gcnae_forward.1}
  #allocation0 [shape = 'u32[]', space=smem, size = 0x4, offset = 0x4, fixed_abs, tag = 'smem constant byte address 0x4 - core index']
  #allocation1 [shape = 'u32[144,128]{1,0:T(1,128)}', space=vmem, size = 0x12000, scoped, tag = 'internal scratch']
  %s0 = inlined_call_operand.vmem [shape: bf16[128,128], index: 0, kind: input, shape index: {}]
  %s1 = inlined_call_operand.vmem [shape: bf16[128,128], index: 1, kind: input, shape index: {}]
  %s2 = inlined_call_operand.vmem [shape: bf16[128,128], index: 2, kind: input, shape index: {}]
  %s3 = inlined_call_operand.vmem [shape: bf16[128,128], index: 3, kind: input, shape index: {}]
  %s4 = inlined_call_operand.vmem [shape: bf16[128,128], index: 4, kind: input, shape index: {}]
  %s5 = inlined_call_operand.vmem [shape: bf16[128,128], index: 5, kind: input, shape index: {}]
  %s6 = inlined_call_operand.vmem [shape: f32[128,128], index: 6, kind: output, shape index: {0}]
  %s7 = inlined_call_operand.vmem [shape: f32[128,128], index: 7, kind: output, shape index: {1}]
  %8 = xla_tuple %s6, %s7
  %s9 = sld [smem:[#allocation0]]
  $region42: #{gcnae_forward.1} parent=0
    _
  %s11 = ssub.s32 1, %s9
  %s12 = scalar_select 0, %s11, %s9
  // Predicated region
  $region2: #{gcnae_forward.1} parent=0 // pred_check
    _
  $region3: #{gcnae_forward.1} parent=0 // pred_check_branch
    %14 = sbr.rel (0) target = $region5
  $region4: #{gcnae_forward.1} parent=0 // pred_region
    _
  $region5: #{gcnae_forward.1} parent=0 // pred_fallthru
    _
  // Predicated region
  $region6: #{gcnae_forward.1} parent=0 // pred_check
    _
  $region7: #{gcnae_forward.1} parent=0 // pred_check_branch
    %16 = sbr.rel (0) target = $region9
  $region8: #{gcnae_forward.1} parent=0 // pred_region
    _
  $region9: #{gcnae_forward.1} parent=0 // pred_fallthru
    _
  // Predicated region
  $region10: #{gcnae_forward.1} parent=0 // pred_check
    _
  $region11: #{gcnae_forward.1} parent=0 // pred_check_branch
    %18 = sbr.rel (0) target = $region13
  $region12: #{gcnae_forward.1} parent=0 // pred_region
    _
  $region13: #{gcnae_forward.1} parent=0 // pred_fallthru
    _
  // Predicated region
  $region14: #{gcnae_forward.1} parent=0 // pred_check
    _
  $region15: #{gcnae_forward.1} parent=0 // pred_check_branch
    %20 = sbr.rel (0) target = $region17
  $region16: #{gcnae_forward.1} parent=0 // pred_region
    _
  $region17: #{gcnae_forward.1} parent=0 // pred_fallthru
    _
  // Predicated region
  $region18: #{gcnae_forward.1} parent=0 // pred_check
    _
  $region19: #{gcnae_forward.1} parent=0 // pred_check_branch
    %22 = sbr.rel (0) target = $region21
  $region20: #{gcnae_forward.1} parent=0 // pred_region
    _
  $region21: #{gcnae_forward.1} parent=0 // pred_fallthru
    _
  // Predicated region
  $region22: #{gcnae_forward.1} parent=0 // pred_check
    _
  $region23: #{gcnae_forward.1} parent=0 // pred_check_branch
    %24 = sbr.rel (0) target = $region25
  $region24: #{gcnae_forward.1} parent=0 // pred_region
    _
  $region25: #{gcnae_forward.1} parent=0 // pred_fallthru
    _
  %v26 = vld [vmem:[%s0] sm:$0xf]
  %v27 = vld [vmem:[%s0 + $0x4] sm:$0xf]
  %v28 = vld [vmem:[%s0 + $0x8] sm:$0xf]
  %v29 = vld [vmem:[%s0 + $0xc] sm:$0xf]
  %v30 = vld [vmem:[%s0 + $0x10] sm:$0xf]
  %v31 = vld [vmem:[%s0 + $0x14] sm:$0xf]
  %v32 = vld [vmem:[%s0 + $0x18] sm:$0xf]
  %v33 = vld [vmem:[%s0 + $0x1c] sm:$0xf]
  %v34 = vld [vmem:[%s0 + $0x20] sm:$0xf]
  %v35 = vld [vmem:[%s0 + $0x24] sm:$0xf]
  %v36 = vld [vmem:[%s0 + $0x28] sm:$0xf]
  %v37 = vld [vmem:[%s0 + $0x2c] sm:$0xf]
  %v38 = vld [vmem:[%s0 + $0x30] sm:$0xf]
  %v39 = vld [vmem:[%s0 + $0x34] sm:$0xf]
  %v40 = vld [vmem:[%s0 + $0x38] sm:$0xf]
  %v41 = vld [vmem:[%s0 + $0x3c] sm:$0xf]
  %v42 = vld [vmem:[%s1] sm:$0xf]
  %v43 = vld [vmem:[%s1 + $0x4] sm:$0xf]
  %v44 = vld [vmem:[%s1 + $0x8] sm:$0xf]
  %v45 = vld [vmem:[%s1 + $0xc] sm:$0xf]
  %v46 = vld [vmem:[%s1 + $0x10] sm:$0xf]
  %v47 = vld [vmem:[%s1 + $0x14] sm:$0xf]
  %v48 = vld [vmem:[%s1 + $0x18] sm:$0xf]
  %v49 = vld [vmem:[%s1 + $0x1c] sm:$0xf]
  %v50 = vld [vmem:[%s1 + $0x20] sm:$0xf]
  %v51 = vld [vmem:[%s1 + $0x24] sm:$0xf]
  %v52 = vld [vmem:[%s1 + $0x28] sm:$0xf]
  %v53 = vld [vmem:[%s1 + $0x2c] sm:$0xf]
  %v54 = vld [vmem:[%s1 + $0x30] sm:$0xf]
  %v55 = vld [vmem:[%s1 + $0x34] sm:$0xf]
  %v56 = vld [vmem:[%s1 + $0x38] sm:$0xf]
  %v57 = vld [vmem:[%s1 + $0x3c] sm:$0xf]
  %v58 = vld [vmem:[%s2] sm:$0xf]
  %v59 = vld [vmem:[%s2 + $0x4] sm:$0xf]
  %v60 = vld [vmem:[%s2 + $0x8] sm:$0xf]
  %v61 = vld [vmem:[%s2 + $0xc] sm:$0xf]
  %v62 = vld [vmem:[%s2 + $0x10] sm:$0xf]
  %v63 = vld [vmem:[%s2 + $0x14] sm:$0xf]
  %v64 = vld [vmem:[%s2 + $0x18] sm:$0xf]
  %v65 = vld [vmem:[%s2 + $0x1c] sm:$0xf]
  %v66 = vld [vmem:[%s2 + $0x20] sm:$0xf]
  %v67 = vld [vmem:[%s2 + $0x24] sm:$0xf]
  %v68 = vld [vmem:[%s2 + $0x28] sm:$0xf]
  %v69 = vld [vmem:[%s2 + $0x2c] sm:$0xf]
  %v70 = vld [vmem:[%s2 + $0x30] sm:$0xf]
  %v71 = vld [vmem:[%s2 + $0x34] sm:$0xf]
  %v72 = vld [vmem:[%s2 + $0x38] sm:$0xf]
  %v73 = vld [vmem:[%s2 + $0x3c] sm:$0xf]
  %v90 = vunpack.c.l.b16 %v42
  %v91 = vunpack.c.l.b16 %v43
  %v92 = vunpack.c.l.b16 %v44
  %v93 = vunpack.c.l.b16 %v45
  %v94 = vunpack.c.l.b16 %v46
  %v95 = vunpack.c.l.b16 %v47
  %v96 = vunpack.c.l.b16 %v48
  %v97 = vunpack.c.l.b16 %v49
  %v98 = vunpack.c.l.b16 %v50
  %v99 = vunpack.c.l.b16 %v51
  %v100 = vunpack.c.l.b16 %v52
  %v101 = vunpack.c.l.b16 %v53
  %v102 = vunpack.c.l.b16 %v54
  %v103 = vunpack.c.l.b16 %v55
  %v104 = vunpack.c.l.b16 %v56
  %v105 = vunpack.c.l.b16 %v57
  %v106 = vpack.c.b16 %v91, %v90
  %v107 = vpack.c.b16 %v93, %v92
  %v108 = vpack.c.b16 %v95, %v94
  %v109 = vpack.c.b16 %v97, %v96
  %v110 = vpack.c.b16 %v99, %v98
  %v111 = vpack.c.b16 %v101, %v100
  %v112 = vpack.c.b16 %v103, %v102
  %v113 = vpack.c.b16 %v105, %v104
  %v138 = vunpack.c.l.b16 %v58
  %v139 = vunpack.c.l.b16 %v59
  %v140 = vunpack.c.l.b16 %v60
  %v141 = vunpack.c.l.b16 %v61
  %v142 = vunpack.c.l.b16 %v62
  %v143 = vunpack.c.l.b16 %v63
  %v144 = vunpack.c.l.b16 %v64
  %v145 = vunpack.c.l.b16 %v65
  %v146 = vunpack.c.l.b16 %v66
  %v147 = vunpack.c.l.b16 %v67
  %v148 = vunpack.c.l.b16 %v68
  %v149 = vunpack.c.l.b16 %v69
  %v150 = vunpack.c.l.b16 %v70
  %v151 = vunpack.c.l.b16 %v71
  %v152 = vunpack.c.l.b16 %v72
  %v153 = vunpack.c.l.b16 %v73
  %v154 = vpack.c.b16 %v139, %v138
  %v155 = vpack.c.b16 %v141, %v140
  %v156 = vpack.c.b16 %v143, %v142
  %v157 = vpack.c.b16 %v145, %v144
  %v158 = vpack.c.b16 %v147, %v146
  %v159 = vpack.c.b16 %v149, %v148
  %v160 = vpack.c.b16 %v151, %v150
  %v161 = vpack.c.b16 %v153, %v152
  %170 = vmatprep.subr.bf16.mxu0 0
  %171 = vmatpush1.bf16.msra.mxu0 %v154
  %172 = vmatprep.subr.bf16.mxu0 0
  %173 = vmatpush1.bf16.msra.mxu0 %v155
  %174 = vmatprep.subr.bf16.mxu0 0
  %175 = vmatpush1.bf16.msra.mxu0 %v156
  %176 = vmatprep.subr.bf16.mxu0 0
  %177 = vmatpush1.bf16.msra.mxu0 %v157
  %178 = vmatprep.subr.bf16.mxu0 0
  %179 = vmatpush1.bf16.msra.mxu0 %v158
  %180 = vmatprep.subr.bf16.mxu0 0
  %181 = vmatpush1.bf16.msra.mxu0 %v159
  %182 = vmatprep.subr.bf16.mxu0 0
  %183 = vmatpush1.bf16.msra.mxu0 %v160
  %184 = vmatprep.subr.bf16.mxu0 0
  %185 = vmatpush1.bf16.msra.mxu0 %v161
  %186 = vmatprep.subr.bf16.mxu0 0
  %187 = vmatpush1.bf16.msra.mxu0 0
  %188 = vmatprep.subr.bf16.mxu0 0
  %189 = vmatpush1.bf16.msra.mxu0 0
  %190 = vmatprep.subr.bf16.mxu0 0
  %191 = vmatpush1.bf16.msra.mxu0 0
  %192 = vmatprep.subr.bf16.mxu0 0
  %193 = vmatpush1.bf16.msra.mxu0 0
  %194 = vmatprep.subr.bf16.mxu0 0
  %195 = vmatpush1.bf16.msra.mxu0 0
  %196 = vmatprep.subr.bf16.mxu0 0
  %197 = vmatpush1.bf16.msra.mxu0 0
  %198 = vmatprep.subr.bf16.mxu0 0
  %199 = vmatpush1.bf16.msra.mxu0 0
  %200 = vmatprep.subr.bf16.mxu0 0
  %201 = vmatpush1.bf16.msra.mxu0 0
  %202 = vmatprep.mubr.bf16.mxu0 0
  %203 = vmatmul.mubr.bf16.gmra.mrb[0].mxu0 %v106
  %v204 = vpop.f32.mrb[0].mxu0
  %v205 = vadd.f32 0.0, %v204
  %v206 = vpop.f32.mrb[0].mxu0
  %v207 = vpop.f32.mrb[0].mxu0
  %v208 = vadd.f32 0.0, %v207
  %v209 = vpop.f32.mrb[0].mxu0
  %210 = vmatprep.mubr.bf16.mxu0 0
  %211 = vmatmul.mubr.bf16.gmra.mrb[0].mxu0 %v107
  %v212 = vpop.f32.mrb[0].mxu0
  %v213 = vadd.f32 0.0, %v212
  %v214 = vpop.f32.mrb[0].mxu0
  %v215 = vpop.f32.mrb[0].mxu0
  %v216 = vadd.f32 0.0, %v215
  %v217 = vpop.f32.mrb[0].mxu0
  %218 = vmatprep.mubr.bf16.mxu0 0
  %219 = vmatmul.mubr.bf16.gmra.mrb[0].mxu0 %v108
  %v220 = vpop.f32.mrb[0].mxu0
  %v221 = vadd.f32 0.0, %v220
  %v222 = vpop.f32.mrb[0].mxu0
  %v223 = vpop.f32.mrb[0].mxu0
  %v224 = vadd.f32 0.0, %v223
  %v225 = vpop.f32.mrb[0].mxu0
  %226 = vmatprep.mubr.bf16.mxu0 0
  %227 = vmatmul.mubr.bf16.gmra.mrb[0].mxu0 %v109
  %v228 = vpop.f32.mrb[0].mxu0
  %v229 = vadd.f32 0.0, %v228
  %v230 = vpop.f32.mrb[0].mxu0
  %v231 = vpop.f32.mrb[0].mxu0
  %v232 = vadd.f32 0.0, %v231
  %v233 = vpop.f32.mrb[0].mxu0
  %234 = vmatprep.mubr.bf16.mxu0 0
  %235 = vmatmul.mubr.bf16.gmra.mrb[0].mxu0 %v110
  %v236 = vpop.f32.mrb[0].mxu0
  %v237 = vadd.f32 0.0, %v236
  %v238 = vpop.f32.mrb[0].mxu0
  %v239 = vpop.f32.mrb[0].mxu0
  %v240 = vadd.f32 0.0, %v239
  %v241 = vpop.f32.mrb[0].mxu0
  %242 = vmatprep.mubr.bf16.mxu0 0
  %243 = vmatmul.mubr.bf16.gmra.mrb[0].mxu0 %v111
  %v244 = vpop.f32.mrb[0].mxu0
  %v245 = vadd.f32 0.0, %v244
  %v246 = vpop.f32.mrb[0].mxu0
  %v247 = vpop.f32.mrb[0].mxu0
  %v248 = vadd.f32 0.0, %v247
  %v249 = vpop.f32.mrb[0].mxu0
  %250 = vmatprep.mubr.bf16.mxu0 0
  %251 = vmatmul.mubr.bf16.gmra.mrb[0].mxu0 %v112
  %v252 = vpop.f32.mrb[0].mxu0
  %v253 = vadd.f32 0.0, %v252
  %v254 = vpop.f32.mrb[0].mxu0
  %v255 = vpop.f32.mrb[0].mxu0
  %v256 = vadd.f32 0.0, %v255
  %v257 = vpop.f32.mrb[0].mxu0
  %258 = vmatprep.mubr.bf16.mxu0 0
  %259 = vmatmul.mubr.bf16.gmra.mrb[0].mxu0 %v113
  %v260 = vpop.f32.mrb[0].mxu0
  %v261 = vadd.f32 0.0, %v260
  %v262 = vpop.f32.mrb[0].mxu0
  %v263 = vpop.f32.mrb[0].mxu0
  %v264 = vadd.f32 0.0, %v263
  %v265 = vpop.f32.mrb[0].mxu0
  %266 = vdwg.mxu0
  %v267 = vpack.c.bf16 %v208, %v205
  %v268 = vpack.c.bf16 %v216, %v213
  %v269 = vpack.c.bf16 %v224, %v221
  %v270 = vpack.c.bf16 %v232, %v229
  %v271 = vpack.c.bf16 %v240, %v237
  %v272 = vpack.c.bf16 %v248, %v245
  %v273 = vpack.c.bf16 %v256, %v253
  %v274 = vpack.c.bf16 %v264, %v261
  %v291 = vunpack.c.l.b16 %v26
  %v292 = vunpack.c.l.b16 %v27
  %v293 = vunpack.c.l.b16 %v28
  %v294 = vunpack.c.l.b16 %v29
  %v295 = vunpack.c.l.b16 %v30
  %v296 = vunpack.c.l.b16 %v31
  %v297 = vunpack.c.l.b16 %v32
  %v298 = vunpack.c.l.b16 %v33
  %v299 = vunpack.c.l.b16 %v34
  %v300 = vunpack.c.l.b16 %v35
  %v301 = vunpack.c.l.b16 %v36
  %v302 = vunpack.c.l.b16 %v37
  %v303 = vunpack.c.l.b16 %v38
  %v304 = vunpack.c.l.b16 %v39
  %v305 = vunpack.c.l.b16 %v40
  %v306 = vunpack.c.l.b16 %v41
  %v307 = vpack.c.b16 %v292, %v291
  %v308 = vpack.c.b16 %v294, %v293
  %v309 = vpack.c.b16 %v296, %v295
  %v310 = vpack.c.b16 %v298, %v297
  %v311 = vpack.c.b16 %v300, %v299
  %v312 = vpack.c.b16 %v302, %v301
  %v313 = vpack.c.b16 %v304, %v303
  %v314 = vpack.c.b16 %v306, %v305
  %323 = vmatprep.subr.bf16.mxu0 0
  %324 = vmatpush1.bf16.msra.mxu0 %v267
  %325 = vmatprep.subr.bf16.mxu0 0
  %326 = vmatpush1.bf16.msra.mxu0 %v268
  %327 = vmatprep.subr.bf16.mxu0 0
  %328 = vmatpush1.bf16.msra.mxu0 %v269
  %329 = vmatprep.subr.bf16.mxu0 0
  %330 = vmatpush1.bf16.msra.mxu0 %v270
  %331 = vmatprep.subr.bf16.mxu0 0
  %332 = vmatpush1.bf16.msra.mxu0 %v271
  %333 = vmatprep.subr.bf16.mxu0 0
  %334 = vmatpush1.bf16.msra.mxu0 %v272
  %335 = vmatprep.subr.bf16.mxu0 0
  %336 = vmatpush1.bf16.msra.mxu0 %v273
  %337 = vmatprep.subr.bf16.mxu0 0
  %338 = vmatpush1.bf16.msra.mxu0 %v274
  %339 = vmatprep.subr.bf16.mxu0 0
  %340 = vmatpush1.bf16.msra.mxu0 0
  %341 = vmatprep.subr.bf16.mxu0 0
  %342 = vmatpush1.bf16.msra.mxu0 0
  %343 = vmatprep.subr.bf16.mxu0 0
  %344 = vmatpush1.bf16.msra.mxu0 0
  %345 = vmatprep.subr.bf16.mxu0 0
  %346 = vmatpush1.bf16.msra.mxu0 0
  %347 = vmatprep.subr.bf16.mxu0 0
  %348 = vmatpush1.bf16.msra.mxu0 0
  %349 = vmatprep.subr.bf16.mxu0 0
  %350 = vmatpush1.bf16.msra.mxu0 0
  %351 = vmatprep.subr.bf16.mxu0 0
  %352 = vmatpush1.bf16.msra.mxu0 0
  %353 = vmatprep.subr.bf16.mxu0 0
  %354 = vmatpush1.bf16.msra.mxu0 0
  %355 = vmatprep.mubr.bf16.mxu0 0
  %356 = vmatmul.mubr.bf16.gmra.mrb[0].mxu0 %v307
  %v357 = vpop.f32.mrb[0].mxu0
  %v358 = vadd.f32 0.0, %v357
  %v359 = vpop.f32.mrb[0].mxu0
  %v360 = vpop.f32.mrb[0].mxu0
  %v361 = vadd.f32 0.0, %v360
  %v362 = vpop.f32.mrb[0].mxu0
  %363 = vmatprep.mubr.bf16.mxu0 0
  %364 = vmatmul.mubr.bf16.gmra.mrb[0].mxu0 %v308
  %v365 = vpop.f32.mrb[0].mxu0
  %v366 = vadd.f32 0.0, %v365
  %v367 = vpop.f32.mrb[0].mxu0
  %v368 = vpop.f32.mrb[0].mxu0
  %v369 = vadd.f32 0.0, %v368
  %v370 = vpop.f32.mrb[0].mxu0
  %371 = vmatprep.mubr.bf16.mxu0 0
  %372 = vmatmul.mubr.bf16.gmra.mrb[0].mxu0 %v309
  %v373 = vpop.f32.mrb[0].mxu0
  %v374 = vadd.f32 0.0, %v373
  %v375 = vpop.f32.mrb[0].mxu0
  %v376 = vpop.f32.mrb[0].mxu0
  %v377 = vadd.f32 0.0, %v376
  %v378 = vpop.f32.mrb[0].mxu0
  %379 = vmatprep.mubr.bf16.mxu0 0
  %380 = vmatmul.mubr.bf16.gmra.mrb[0].mxu0 %v310
  %v381 = vpop.f32.mrb[0].mxu0
  %v382 = vadd.f32 0.0, %v381
  %v383 = vpop.f32.mrb[0].mxu0
  %v384 = vpop.f32.mrb[0].mxu0
  %v385 = vadd.f32 0.0, %v384
  %v386 = vpop.f32.mrb[0].mxu0
  %387 = vmatprep.mubr.bf16.mxu0 0
  %388 = vmatmul.mubr.bf16.gmra.mrb[0].mxu0 %v311
  %v389 = vpop.f32.mrb[0].mxu0
  %v390 = vadd.f32 0.0, %v389
  %v391 = vpop.f32.mrb[0].mxu0
  %v392 = vpop.f32.mrb[0].mxu0
  %v393 = vadd.f32 0.0, %v392
  %v394 = vpop.f32.mrb[0].mxu0
  %395 = vmatprep.mubr.bf16.mxu0 0
  %396 = vmatmul.mubr.bf16.gmra.mrb[0].mxu0 %v312
  %v397 = vpop.f32.mrb[0].mxu0
  %v398 = vadd.f32 0.0, %v397
  %v399 = vpop.f32.mrb[0].mxu0
  %v400 = vpop.f32.mrb[0].mxu0
  %v401 = vadd.f32 0.0, %v400
  %v402 = vpop.f32.mrb[0].mxu0
  %403 = vmatprep.mubr.bf16.mxu0 0
  %404 = vmatmul.mubr.bf16.gmra.mrb[0].mxu0 %v313
  %v405 = vpop.f32.mrb[0].mxu0
  %v406 = vadd.f32 0.0, %v405
  %v407 = vpop.f32.mrb[0].mxu0
  %v408 = vpop.f32.mrb[0].mxu0
  %v409 = vadd.f32 0.0, %v408
  %v410 = vpop.f32.mrb[0].mxu0
  %411 = vmatprep.mubr.bf16.mxu0 0
  %412 = vmatmul.mubr.bf16.gmra.mrb[0].mxu0 %v314
  %v413 = vpop.f32.mrb[0].mxu0
  %v414 = vadd.f32 0.0, %v413
  %v415 = vpop.f32.mrb[0].mxu0
  %v416 = vpop.f32.mrb[0].mxu0
  %v417 = vadd.f32 0.0, %v416
  %v418 = vpop.f32.mrb[0].mxu0
  %419 = vdwg.mxu0
  %v420 = vmax.f32 %v358, 0.0
  %v421 = vmax.f32 %v361, 0.0
  %v422 = vmax.f32 %v366, 0.0
  %v423 = vmax.f32 %v369, 0.0
  %v424 = vmax.f32 %v374, 0.0
  %v425 = vmax.f32 %v377, 0.0
  %v426 = vmax.f32 %v382, 0.0
  %v427 = vmax.f32 %v385, 0.0
  %v428 = vmax.f32 %v390, 0.0
  %v429 = vmax.f32 %v393, 0.0
  %v430 = vmax.f32 %v398, 0.0
  %v431 = vmax.f32 %v401, 0.0
  %v432 = vmax.f32 %v406, 0.0
  %v433 = vmax.f32 %v409, 0.0
  %v434 = vmax.f32 %v414, 0.0
  %v435 = vmax.f32 %v417, 0.0
  %v436 = vpack.c.bf16 %v421, %v420
  %v437 = vpack.c.bf16 %v423, %v422
  %v438 = vpack.c.bf16 %v425, %v424
  %v439 = vpack.c.bf16 %v427, %v426
  %v440 = vpack.c.bf16 %v429, %v428
  %v441 = vpack.c.bf16 %v431, %v430
  %v442 = vpack.c.bf16 %v433, %v432
  %v443 = vpack.c.bf16 %v435, %v434
  %v444 = vld [vmem:[%s3] sm:$0xf]
  %v445 = vld [vmem:[%s3 + $0x4] sm:$0xf]
  %v446 = vld [vmem:[%s3 + $0x8] sm:$0xf]
  %v447 = vld [vmem:[%s3 + $0xc] sm:$0xf]
  %v448 = vld [vmem:[%s3 + $0x10] sm:$0xf]
  %v449 = vld [vmem:[%s3 + $0x14] sm:$0xf]
  %v450 = vld [vmem:[%s3 + $0x18] sm:$0xf]
  %v451 = vld [vmem:[%s3 + $0x1c] sm:$0xf]
  %v452 = vld [vmem:[%s3 + $0x20] sm:$0xf]
  %v453 = vld [vmem:[%s3 + $0x24] sm:$0xf]
  %v454 = vld [vmem:[%s3 + $0x28] sm:$0xf]
  %v455 = vld [vmem:[%s3 + $0x2c] sm:$0xf]
  %v456 = vld [vmem:[%s3 + $0x30] sm:$0xf]
  %v457 = vld [vmem:[%s3 + $0x34] sm:$0xf]
  %v458 = vld [vmem:[%s3 + $0x38] sm:$0xf]
  %v459 = vld [vmem:[%s3 + $0x3c] sm:$0xf]
  %v476 = vunpack.c.l.b16 %v444
  %v477 = vunpack.c.l.b16 %v445
  %v478 = vunpack.c.l.b16 %v446
  %v479 = vunpack.c.l.b16 %v447
  %v480 = vunpack.c.l.b16 %v448
  %v481 = vunpack.c.l.b16 %v449
  %v482 = vunpack.c.l.b16 %v450
  %v483 = vunpack.c.l.b16 %v451
  %v484 = vunpack.c.l.b16 %v452
  %v485 = vunpack.c.l.b16 %v453
  %v486 = vunpack.c.l.b16 %v454
  %v487 = vunpack.c.l.b16 %v455
  %v488 = vunpack.c.l.b16 %v456
  %v489 = vunpack.c.l.b16 %v457
  %v490 = vunpack.c.l.b16 %v458
  %v491 = vunpack.c.l.b16 %v459
  %v492 = vpack.c.b16 %v477, %v476
  %v493 = vpack.c.b16 %v479, %v478
  %v494 = vpack.c.b16 %v481, %v480
  %v495 = vpack.c.b16 %v483, %v482
  %v496 = vpack.c.b16 %v485, %v484
  %v497 = vpack.c.b16 %v487, %v486
  %v498 = vpack.c.b16 %v489, %v488
  %v499 = vpack.c.b16 %v491, %v490
  %508 = vmatprep.subr.bf16.mxu0 0
  %509 = vmatpush1.bf16.msra.mxu0 %v492
  %510 = vmatprep.subr.bf16.mxu0 0
  %511 = vmatpush1.bf16.msra.mxu0 %v493
  %512 = vmatprep.subr.bf16.mxu0 0
  %513 = vmatpush1.bf16.msra.mxu0 %v494
  %514 = vmatprep.subr.bf16.mxu0 0
  %515 = vmatpush1.bf16.msra.mxu0 %v495
  %516 = vmatprep.subr.bf16.mxu0 0
  %517 = vmatpush1.bf16.msra.mxu0 %v496
  %518 = vmatprep.subr.bf16.mxu0 0
  %519 = vmatpush1.bf16.msra.mxu0 %v497
  %520 = vmatprep.subr.bf16.mxu0 0
  %521 = vmatpush1.bf16.msra.mxu0 %v498
  %522 = vmatprep.subr.bf16.mxu0 0
  %523 = vmatpush1.bf16.msra.mxu0 %v499
  %524 = vmatprep.subr.bf16.mxu0 0
  %525 = vmatpush1.bf16.msra.mxu0 0
  %526 = vmatprep.subr.bf16.mxu0 0
  %527 = vmatpush1.bf16.msra.mxu0 0
  %528 = vmatprep.subr.bf16.mxu0 0
  %529 = vmatpush1.bf16.msra.mxu0 0
  %530 = vmatprep.subr.bf16.mxu0 0
  %531 = vmatpush1.bf16.msra.mxu0 0
  %532 = vmatprep.subr.bf16.mxu0 0
  %533 = vmatpush1.bf16.msra.mxu0 0
  %534 = vmatprep.subr.bf16.mxu0 0
  %535 = vmatpush1.bf16.msra.mxu0 0
  %536 = vmatprep.subr.bf16.mxu0 0
  %537 = vmatpush1.bf16.msra.mxu0 0
  %538 = vmatprep.subr.bf16.mxu0 0
  %539 = vmatpush1.bf16.msra.mxu0 0
  %540 = vmatprep.mubr.bf16.mxu0 0
  %541 = vmatmul.mubr.bf16.gmra.mrb[0].mxu0 %v436
  %v542 = vpop.f32.mrb[0].mxu0
  %v543 = vadd.f32 0.0, %v542
  %v544 = vpop.f32.mrb[0].mxu0
  %v545 = vpop.f32.mrb[0].mxu0
  %v546 = vadd.f32 0.0, %v545
  %v547 = vpop.f32.mrb[0].mxu0
  %548 = vmatprep.mubr.bf16.mxu0 0
  %549 = vmatmul.mubr.bf16.gmra.mrb[0].mxu0 %v437
  %v550 = vpop.f32.mrb[0].mxu0
  %v551 = vadd.f32 0.0, %v550
  %v552 = vpop.f32.mrb[0].mxu0
  %v553 = vpop.f32.mrb[0].mxu0
  %v554 = vadd.f32 0.0, %v553
  %v555 = vpop.f32.mrb[0].mxu0
  %556 = vmatprep.mubr.bf16.mxu0 0
  %557 = vmatmul.mubr.bf16.gmra.mrb[0].mxu0 %v438
  %v558 = vpop.f32.mrb[0].mxu0
  %v559 = vadd.f32 0.0, %v558
  %v560 = vpop.f32.mrb[0].mxu0
  %v561 = vpop.f32.mrb[0].mxu0
  %v562 = vadd.f32 0.0, %v561
  %v563 = vpop.f32.mrb[0].mxu0
  %564 = vmatprep.mubr.bf16.mxu0 0
  %565 = vmatmul.mubr.bf16.gmra.mrb[0].mxu0 %v439
  %v566 = vpop.f32.mrb[0].mxu0
  %v567 = vadd.f32 0.0, %v566
  %v568 = vpop.f32.mrb[0].mxu0
  %v569 = vpop.f32.mrb[0].mxu0
  %v570 = vadd.f32 0.0, %v569
  %v571 = vpop.f32.mrb[0].mxu0
  %572 = vmatprep.mubr.bf16.mxu0 0
  %573 = vmatmul.mubr.bf16.gmra.mrb[0].mxu0 %v440
  %v574 = vpop.f32.mrb[0].mxu0
  %v575 = vadd.f32 0.0, %v574
  %v576 = vpop.f32.mrb[0].mxu0
  %v577 = vpop.f32.mrb[0].mxu0
  %v578 = vadd.f32 0.0, %v577
  %v579 = vpop.f32.mrb[0].mxu0
  %580 = vmatprep.mubr.bf16.mxu0 0
  %581 = vmatmul.mubr.bf16.gmra.mrb[0].mxu0 %v441
  %v582 = vpop.f32.mrb[0].mxu0
  %v583 = vadd.f32 0.0, %v582
  %v584 = vpop.f32.mrb[0].mxu0
  %v585 = vpop.f32.mrb[0].mxu0
  %v586 = vadd.f32 0.0, %v585
  %v587 = vpop.f32.mrb[0].mxu0
  %588 = vmatprep.mubr.bf16.mxu0 0
  %589 = vmatmul.mubr.bf16.gmra.mrb[0].mxu0 %v442
  %v590 = vpop.f32.mrb[0].mxu0
  %v591 = vadd.f32 0.0, %v590
  %v592 = vpop.f32.mrb[0].mxu0
  %v593 = vpop.f32.mrb[0].mxu0
  %v594 = vadd.f32 0.0, %v593
  %v595 = vpop.f32.mrb[0].mxu0
  %596 = vmatprep.mubr.bf16.mxu0 0
  %597 = vmatmul.mubr.bf16.gmra.mrb[0].mxu0 %v443
  %v598 = vpop.f32.mrb[0].mxu0
  %v599 = vadd.f32 0.0, %v598
  %v600 = vpop.f32.mrb[0].mxu0
  %v601 = vpop.f32.mrb[0].mxu0
  %v602 = vadd.f32 0.0, %v601
  %v603 = vpop.f32.mrb[0].mxu0
  %604 = vdwg.mxu0
  %v605 = vpack.c.bf16 %v546, %v543
  %v606 = vpack.c.bf16 %v554, %v551
  %v607 = vpack.c.bf16 %v562, %v559
  %v608 = vpack.c.bf16 %v570, %v567
  %v609 = vpack.c.bf16 %v578, %v575
  %v610 = vpack.c.bf16 %v586, %v583
  %v611 = vpack.c.bf16 %v594, %v591
  %v612 = vpack.c.bf16 %v602, %v599
  %613 = vmatprep.subr.bf16.mxu0 0
  %614 = vmatpush1.bf16.msra.mxu0 %v605
  %615 = vmatprep.subr.bf16.mxu0 0
  %616 = vmatpush1.bf16.msra.mxu0 %v606
  %617 = vmatprep.subr.bf16.mxu0 0
  %618 = vmatpush1.bf16.msra.mxu0 %v607
  %619 = vmatprep.subr.bf16.mxu0 0
  %620 = vmatpush1.bf16.msra.mxu0 %v608
  %621 = vmatprep.subr.bf16.mxu0 0
  %622 = vmatpush1.bf16.msra.mxu0 %v609
  %623 = vmatprep.subr.bf16.mxu0 0
  %624 = vmatpush1.bf16.msra.mxu0 %v610
  %625 = vmatprep.subr.bf16.mxu0 0
  %626 = vmatpush1.bf16.msra.mxu0 %v611
  %627 = vmatprep.subr.bf16.mxu0 0
  %628 = vmatpush1.bf16.msra.mxu0 %v612
  %629 = vmatprep.subr.bf16.mxu0 0
  %630 = vmatpush1.bf16.msra.mxu0 0
  %631 = vmatprep.subr.bf16.mxu0 0
  %632 = vmatpush1.bf16.msra.mxu0 0
  %633 = vmatprep.subr.bf16.mxu0 0
  %634 = vmatpush1.bf16.msra.mxu0 0
  %635 = vmatprep.subr.bf16.mxu0 0
  %636 = vmatpush1.bf16.msra.mxu0 0
  %637 = vmatprep.subr.bf16.mxu0 0
  %638 = vmatpush1.bf16.msra.mxu0 0
  %639 = vmatprep.subr.bf16.mxu0 0
  %640 = vmatpush1.bf16.msra.mxu0 0
  %641 = vmatprep.subr.bf16.mxu0 0
  %642 = vmatpush1.bf16.msra.mxu0 0
  %643 = vmatprep.subr.bf16.mxu0 0
  %644 = vmatpush1.bf16.msra.mxu0 0
  %645 = vmatprep.mubr.bf16.mxu0 0
  %646 = vmatmul.mubr.bf16.gmra.mrb[0].mxu0 %v307
  %v647 = vpop.f32.mrb[0].mxu0
  %v648 = vadd.f32 0.0, %v647
  %v649 = vpop.f32.mrb[0].mxu0
  %v650 = vpop.f32.mrb[0].mxu0
  %v651 = vadd.f32 0.0, %v650
  %v652 = vpop.f32.mrb[0].mxu0
  %653 = vmatprep.mubr.bf16.mxu0 0
  %654 = vmatmul.mubr.bf16.gmra.mrb[0].mxu0 %v308
  %v655 = vpop.f32.mrb[0].mxu0
  %v656 = vadd.f32 0.0, %v655
  %v657 = vpop.f32.mrb[0].mxu0
  %v658 = vpop.f32.mrb[0].mxu0
  %v659 = vadd.f32 0.0, %v658
  %v660 = vpop.f32.mrb[0].mxu0
  %661 = vmatprep.mubr.bf16.mxu0 0
  %662 = vmatmul.mubr.bf16.gmra.mrb[0].mxu0 %v309
  %v663 = vpop.f32.mrb[0].mxu0
  %v664 = vadd.f32 0.0, %v663
  %v665 = vpop.f32.mrb[0].mxu0
  %v666 = vpop.f32.mrb[0].mxu0
  %v667 = vadd.f32 0.0, %v666
  %v668 = vpop.f32.mrb[0].mxu0
  %669 = vmatprep.mubr.bf16.mxu0 0
  %670 = vmatmul.mubr.bf16.gmra.mrb[0].mxu0 %v310
  %v671 = vpop.f32.mrb[0].mxu0
  %v672 = vadd.f32 0.0, %v671
  %v673 = vpop.f32.mrb[0].mxu0
  %v674 = vpop.f32.mrb[0].mxu0
  %v675 = vadd.f32 0.0, %v674
  %v676 = vpop.f32.mrb[0].mxu0
  %677 = vmatprep.mubr.bf16.mxu0 0
  %678 = vmatmul.mubr.bf16.gmra.mrb[0].mxu0 %v311
  %v679 = vpop.f32.mrb[0].mxu0
  %v680 = vadd.f32 0.0, %v679
  %v681 = vpop.f32.mrb[0].mxu0
  %v682 = vpop.f32.mrb[0].mxu0
  %v683 = vadd.f32 0.0, %v682
  %v684 = vpop.f32.mrb[0].mxu0
  %685 = vmatprep.mubr.bf16.mxu0 0
  %686 = vmatmul.mubr.bf16.gmra.mrb[0].mxu0 %v312
  %v687 = vpop.f32.mrb[0].mxu0
  %v688 = vadd.f32 0.0, %v687
  %v689 = vpop.f32.mrb[0].mxu0
  %v690 = vpop.f32.mrb[0].mxu0
  %v691 = vadd.f32 0.0, %v690
  %v692 = vpop.f32.mrb[0].mxu0
  %693 = vmatprep.mubr.bf16.mxu0 0
  %694 = vmatmul.mubr.bf16.gmra.mrb[0].mxu0 %v313
  %v695 = vpop.f32.mrb[0].mxu0
  %v696 = vadd.f32 0.0, %v695
  %v697 = vpop.f32.mrb[0].mxu0
  %v698 = vpop.f32.mrb[0].mxu0
  %v699 = vadd.f32 0.0, %v698
  %v700 = vpop.f32.mrb[0].mxu0
  %701 = vmatprep.mubr.bf16.mxu0 0
  %702 = vmatmul.mubr.bf16.gmra.mrb[0].mxu0 %v314
  %v703 = vpop.f32.mrb[0].mxu0
  %v704 = vadd.f32 0.0, %v703
  %v705 = vpop.f32.mrb[0].mxu0
  %v706 = vpop.f32.mrb[0].mxu0
  %v707 = vadd.f32 0.0, %v706
  %v708 = vpop.f32.mrb[0].mxu0
  %709 = vdwg.mxu0
  %v710 = vpack.c.bf16 %v651, %v648
  %v711 = vpack.c.bf16 %v659, %v656
  %v712 = vpack.c.bf16 %v667, %v664
  %v713 = vpack.c.bf16 %v675, %v672
  %v714 = vpack.c.bf16 %v683, %v680
  %v715 = vpack.c.bf16 %v691, %v688
  %v716 = vpack.c.bf16 %v699, %v696
  %v717 = vpack.c.bf16 %v707, %v704
  %v718 = vld [vmem:[%s4] sm:$0xf]
  %v719 = vld [vmem:[%s4 + $0x4] sm:$0xf]
  %v720 = vld [vmem:[%s4 + $0x8] sm:$0xf]
  %v721 = vld [vmem:[%s4 + $0xc] sm:$0xf]
  %v722 = vld [vmem:[%s4 + $0x10] sm:$0xf]
  %v723 = vld [vmem:[%s4 + $0x14] sm:$0xf]
  %v724 = vld [vmem:[%s4 + $0x18] sm:$0xf]
  %v725 = vld [vmem:[%s4 + $0x1c] sm:$0xf]
  %v726 = vld [vmem:[%s4 + $0x20] sm:$0xf]
  %v727 = vld [vmem:[%s4 + $0x24] sm:$0xf]
  %v728 = vld [vmem:[%s4 + $0x28] sm:$0xf]
  %v729 = vld [vmem:[%s4 + $0x2c] sm:$0xf]
  %v730 = vld [vmem:[%s4 + $0x30] sm:$0xf]
  %v731 = vld [vmem:[%s4 + $0x34] sm:$0xf]
  %v732 = vld [vmem:[%s4 + $0x38] sm:$0xf]
  %v733 = vld [vmem:[%s4 + $0x3c] sm:$0xf]
  %v750 = vunpack.c.l.b16 %v718
  %v751 = vunpack.c.l.b16 %v719
  %v752 = vunpack.c.l.b16 %v720
  %v753 = vunpack.c.l.b16 %v721
  %v754 = vunpack.c.l.b16 %v722
  %v755 = vunpack.c.l.b16 %v723
  %v756 = vunpack.c.l.b16 %v724
  %v757 = vunpack.c.l.b16 %v725
  %v758 = vunpack.c.l.b16 %v726
  %v759 = vunpack.c.l.b16 %v727
  %v760 = vunpack.c.l.b16 %v728
  %v761 = vunpack.c.l.b16 %v729
  %v762 = vunpack.c.l.b16 %v730
  %v763 = vunpack.c.l.b16 %v731
  %v764 = vunpack.c.l.b16 %v732
  %v765 = vunpack.c.l.b16 %v733
  %v766 = vpack.c.b16 %v751, %v750
  %v767 = vpack.c.b16 %v753, %v752
  %v768 = vpack.c.b16 %v755, %v754
  %v769 = vpack.c.b16 %v757, %v756
  %v770 = vpack.c.b16 %v759, %v758
  %v771 = vpack.c.b16 %v761, %v760
  %v772 = vpack.c.b16 %v763, %v762
  %v773 = vpack.c.b16 %v765, %v764
  %782 = vmatprep.subr.bf16.mxu0 0
  %783 = vmatpush1.bf16.msra.mxu0 %v766
  %784 = vmatprep.subr.bf16.mxu0 0
  %785 = vmatpush1.bf16.msra.mxu0 %v767
  %786 = vmatprep.subr.bf16.mxu0 0
  %787 = vmatpush1.bf16.msra.mxu0 %v768
  %788 = vmatprep.subr.bf16.mxu0 0
  %789 = vmatpush1.bf16.msra.mxu0 %v769
  %790 = vmatprep.subr.bf16.mxu0 0
  %791 = vmatpush1.bf16.msra.mxu0 %v770
  %792 = vmatprep.subr.bf16.mxu0 0
  %793 = vmatpush1.bf16.msra.mxu0 %v771
  %794 = vmatprep.subr.bf16.mxu0 0
  %795 = vmatpush1.bf16.msra.mxu0 %v772
  %796 = vmatprep.subr.bf16.mxu0 0
  %797 = vmatpush1.bf16.msra.mxu0 %v773
  %798 = vmatprep.subr.bf16.mxu0 0
  %799 = vmatpush1.bf16.msra.mxu0 0
  %800 = vmatprep.subr.bf16.mxu0 0
  %801 = vmatpush1.bf16.msra.mxu0 0
  %802 = vmatprep.subr.bf16.mxu0 0
  %803 = vmatpush1.bf16.msra.mxu0 0
  %804 = vmatprep.subr.bf16.mxu0 0
  %805 = vmatpush1.bf16.msra.mxu0 0
  %806 = vmatprep.subr.bf16.mxu0 0
  %807 = vmatpush1.bf16.msra.mxu0 0
  %808 = vmatprep.subr.bf16.mxu0 0
  %809 = vmatpush1.bf16.msra.mxu0 0
  %810 = vmatprep.subr.bf16.mxu0 0
  %811 = vmatpush1.bf16.msra.mxu0 0
  %812 = vmatprep.subr.bf16.mxu0 0
  %813 = vmatpush1.bf16.msra.mxu0 0
  %814 = vmatprep.mubr.bf16.mxu0 0
  %815 = vmatmul.mubr.bf16.gmra.mrb[0].mxu0 %v710
  %v816 = vpop.f32.mrb[0].mxu0
  %v817 = vadd.f32 0.0, %v816
  %v818 = vpop.f32.mrb[0].mxu0
  %v819 = vpop.f32.mrb[0].mxu0
  %v820 = vadd.f32 0.0, %v819
  %v821 = vpop.f32.mrb[0].mxu0
  %822 = vmatprep.mubr.bf16.mxu0 0
  %823 = vmatmul.mubr.bf16.gmra.mrb[0].mxu0 %v711
  %v824 = vpop.f32.mrb[0].mxu0
  %v825 = vadd.f32 0.0, %v824
  %v826 = vpop.f32.mrb[0].mxu0
  %v827 = vpop.f32.mrb[0].mxu0
  %v828 = vadd.f32 0.0, %v827
  %v829 = vpop.f32.mrb[0].mxu0
  %830 = vmatprep.mubr.bf16.mxu0 0
  %831 = vmatmul.mubr.bf16.gmra.mrb[0].mxu0 %v712
  %v832 = vpop.f32.mrb[0].mxu0
  %v833 = vadd.f32 0.0, %v832
  %v834 = vpop.f32.mrb[0].mxu0
  %v835 = vpop.f32.mrb[0].mxu0
  %v836 = vadd.f32 0.0, %v835
  %v837 = vpop.f32.mrb[0].mxu0
  %838 = vmatprep.mubr.bf16.mxu0 0
  %839 = vmatmul.mubr.bf16.gmra.mrb[0].mxu0 %v713
  %v840 = vpop.f32.mrb[0].mxu0
  %v841 = vadd.f32 0.0, %v840
  %v842 = vpop.f32.mrb[0].mxu0
  %v843 = vpop.f32.mrb[0].mxu0
  %v844 = vadd.f32 0.0, %v843
  %v845 = vpop.f32.mrb[0].mxu0
  %846 = vmatprep.mubr.bf16.mxu0 0
  %847 = vmatmul.mubr.bf16.gmra.mrb[0].mxu0 %v714
  %v848 = vpop.f32.mrb[0].mxu0
  %v849 = vadd.f32 0.0, %v848
  %v850 = vpop.f32.mrb[0].mxu0
  %v851 = vpop.f32.mrb[0].mxu0
  %v852 = vadd.f32 0.0, %v851
  %v853 = vpop.f32.mrb[0].mxu0
  %854 = vmatprep.mubr.bf16.mxu0 0
  %855 = vmatmul.mubr.bf16.gmra.mrb[0].mxu0 %v715
  %v856 = vpop.f32.mrb[0].mxu0
  %v857 = vadd.f32 0.0, %v856
  %v858 = vpop.f32.mrb[0].mxu0
  %v859 = vpop.f32.mrb[0].mxu0
  %v860 = vadd.f32 0.0, %v859
  %v861 = vpop.f32.mrb[0].mxu0
  %862 = vmatprep.mubr.bf16.mxu0 0
  %863 = vmatmul.mubr.bf16.gmra.mrb[0].mxu0 %v716
  %v864 = vpop.f32.mrb[0].mxu0
  %v865 = vadd.f32 0.0, %v864
  %v866 = vpop.f32.mrb[0].mxu0
  %v867 = vpop.f32.mrb[0].mxu0
  %v868 = vadd.f32 0.0, %v867
  %v869 = vpop.f32.mrb[0].mxu0
  %870 = vmatprep.mubr.bf16.mxu0 0
  %871 = vmatmul.mubr.bf16.gmra.mrb[0].mxu0 %v717
  %v872 = vpop.f32.mrb[0].mxu0
  %v873 = vadd.f32 0.0, %v872
  %v874 = vpop.f32.mrb[0].mxu0
  %v875 = vpop.f32.mrb[0].mxu0
  %v876 = vadd.f32 0.0, %v875
  %v877 = vpop.f32.mrb[0].mxu0
  %878 = vdwg.mxu0
  %v879 = vpack.c.bf16 %v820, %v817
  %v880 = vpack.c.bf16 %v828, %v825
  %v881 = vpack.c.bf16 %v836, %v833
  %v882 = vpack.c.bf16 %v844, %v841
  %v883 = vpack.c.bf16 %v852, %v849
  %v884 = vpack.c.bf16 %v860, %v857
  %v885 = vpack.c.bf16 %v868, %v865
  %v886 = vpack.c.bf16 %v876, %v873
  %887 = vmatprep.subr.bf16.mxu0 0
  %888 = vmatpush1.bf16.msra.mxu0 %v879
  %889 = vmatprep.subr.bf16.mxu0 0
  %890 = vmatpush1.bf16.msra.mxu0 %v880
  %891 = vmatprep.subr.bf16.mxu0 0
  %892 = vmatpush1.bf16.msra.mxu0 %v881
  %893 = vmatprep.subr.bf16.mxu0 0
  %894 = vmatpush1.bf16.msra.mxu0 %v882
  %895 = vmatprep.subr.bf16.mxu0 0
  %896 = vmatpush1.bf16.msra.mxu0 %v883
  %897 = vmatprep.subr.bf16.mxu0 0
  %898 = vmatpush1.bf16.msra.mxu0 %v884
  %899 = vmatprep.subr.bf16.mxu0 0
  %900 = vmatpush1.bf16.msra.mxu0 %v885
  %901 = vmatprep.subr.bf16.mxu0 0
  %902 = vmatpush1.bf16.msra.mxu0 %v886
  %903 = vmatprep.subr.bf16.mxu0 0
  %904 = vmatpush1.bf16.msra.mxu0 0
  %905 = vmatprep.subr.bf16.mxu0 0
  %906 = vmatpush1.bf16.msra.mxu0 0
  %907 = vmatprep.subr.bf16.mxu0 0
  %908 = vmatpush1.bf16.msra.mxu0 0
  %909 = vmatprep.subr.bf16.mxu0 0
  %910 = vmatpush1.bf16.msra.mxu0 0
  %911 = vmatprep.subr.bf16.mxu0 0
  %912 = vmatpush1.bf16.msra.mxu0 0
  %913 = vmatprep.subr.bf16.mxu0 0
  %914 = vmatpush1.bf16.msra.mxu0 0
  %915 = vmatprep.subr.bf16.mxu0 0
  %916 = vmatpush1.bf16.msra.mxu0 0
  %917 = vmatprep.subr.bf16.mxu0 0
  %918 = vmatpush1.bf16.msra.mxu0 0
  %919 = vmatprep.mubr.bf16.mxu0 0
  %920 = vmatmul.mubr.bf16.gmra.mrb[0].mxu0 %v307
  %v921 = vpop.f32.mrb[0].mxu0
  %v922 = vadd.f32 0.0, %v921
  %v923 = vpop.f32.mrb[0].mxu0
  %v924 = vpop.f32.mrb[0].mxu0
  %v925 = vadd.f32 0.0, %v924
  %v926 = vpop.f32.mrb[0].mxu0
  %927 = vmatprep.mubr.bf16.mxu0 0
  %928 = vmatmul.mubr.bf16.gmra.mrb[0].mxu0 %v308
  %v929 = vpop.f32.mrb[0].mxu0
  %v930 = vadd.f32 0.0, %v929
  %v931 = vpop.f32.mrb[0].mxu0
  %v932 = vpop.f32.mrb[0].mxu0
  %v933 = vadd.f32 0.0, %v932
  %v934 = vpop.f32.mrb[0].mxu0
  %935 = vmatprep.mubr.bf16.mxu0 0
  %936 = vmatmul.mubr.bf16.gmra.mrb[0].mxu0 %v309
  %v937 = vpop.f32.mrb[0].mxu0
  %v938 = vadd.f32 0.0, %v937
  %v939 = vpop.f32.mrb[0].mxu0
  %v940 = vpop.f32.mrb[0].mxu0
  %v941 = vadd.f32 0.0, %v940
  %v942 = vpop.f32.mrb[0].mxu0
  %943 = vmatprep.mubr.bf16.mxu0 0
  %944 = vmatmul.mubr.bf16.gmra.mrb[0].mxu0 %v310
  %v945 = vpop.f32.mrb[0].mxu0
  %v946 = vadd.f32 0.0, %v945
  %v947 = vpop.f32.mrb[0].mxu0
  %v948 = vpop.f32.mrb[0].mxu0
  %v949 = vadd.f32 0.0, %v948
  %v950 = vpop.f32.mrb[0].mxu0
  %951 = vmatprep.mubr.bf16.mxu0 0
  %952 = vmatmul.mubr.bf16.gmra.mrb[0].mxu0 %v311
  %v953 = vpop.f32.mrb[0].mxu0
  %v954 = vadd.f32 0.0, %v953
  %v955 = vpop.f32.mrb[0].mxu0
  %v956 = vpop.f32.mrb[0].mxu0
  %v957 = vadd.f32 0.0, %v956
  %v958 = vpop.f32.mrb[0].mxu0
  %959 = vmatprep.mubr.bf16.mxu0 0
  %960 = vmatmul.mubr.bf16.gmra.mrb[0].mxu0 %v312
  %v961 = vpop.f32.mrb[0].mxu0
  %v962 = vadd.f32 0.0, %v961
  %v963 = vpop.f32.mrb[0].mxu0
  %v964 = vpop.f32.mrb[0].mxu0
  %v965 = vadd.f32 0.0, %v964
  %v966 = vpop.f32.mrb[0].mxu0
  %967 = vmatprep.mubr.bf16.mxu0 0
  %968 = vmatmul.mubr.bf16.gmra.mrb[0].mxu0 %v313
  %v969 = vpop.f32.mrb[0].mxu0
  %v970 = vadd.f32 0.0, %v969
  %v971 = vpop.f32.mrb[0].mxu0
  %v972 = vpop.f32.mrb[0].mxu0
  %v973 = vadd.f32 0.0, %v972
  %v974 = vpop.f32.mrb[0].mxu0
  %975 = vmatprep.mubr.bf16.mxu0 0
  %976 = vmatmul.mubr.bf16.gmra.mrb[0].mxu0 %v314
  %v977 = vpop.f32.mrb[0].mxu0
  %v978 = vadd.f32 0.0, %v977
  %v979 = vpop.f32.mrb[0].mxu0
  %v980 = vpop.f32.mrb[0].mxu0
  %v981 = vadd.f32 0.0, %v980
  %v982 = vpop.f32.mrb[0].mxu0
  %983 = vdwg.mxu0
  %v984 = vmax.f32 %v922, 0.0
  %v985 = vmax.f32 %v925, 0.0
  %v986 = vmax.f32 %v930, 0.0
  %v987 = vmax.f32 %v933, 0.0
  %v988 = vmax.f32 %v938, 0.0
  %v989 = vmax.f32 %v941, 0.0
  %v990 = vmax.f32 %v946, 0.0
  %v991 = vmax.f32 %v949, 0.0
  %v992 = vmax.f32 %v954, 0.0
  %v993 = vmax.f32 %v957, 0.0
  %v994 = vmax.f32 %v962, 0.0
  %v995 = vmax.f32 %v965, 0.0
  %v996 = vmax.f32 %v970, 0.0
  %v997 = vmax.f32 %v973, 0.0
  %v998 = vmax.f32 %v978, 0.0
  %v999 = vmax.f32 %v981, 0.0
  %v1000 = vpack.c.bf16 %v985, %v984
  %v1001 = vpack.c.bf16 %v987, %v986
  %v1002 = vpack.c.bf16 %v989, %v988
  %v1003 = vpack.c.bf16 %v991, %v990
  %v1004 = vpack.c.bf16 %v993, %v992
  %v1005 = vpack.c.bf16 %v995, %v994
  %v1006 = vpack.c.bf16 %v997, %v996
  %v1007 = vpack.c.bf16 %v999, %v998
  %v1008 = vld [vmem:[%s5] sm:$0xf]
  %v1009 = vld [vmem:[%s5 + $0x4] sm:$0xf]
  %v1010 = vld [vmem:[%s5 + $0x8] sm:$0xf]
  %v1011 = vld [vmem:[%s5 + $0xc] sm:$0xf]
  %v1012 = vld [vmem:[%s5 + $0x10] sm:$0xf]
  %v1013 = vld [vmem:[%s5 + $0x14] sm:$0xf]
  %v1014 = vld [vmem:[%s5 + $0x18] sm:$0xf]
  %v1015 = vld [vmem:[%s5 + $0x1c] sm:$0xf]
  %v1016 = vld [vmem:[%s5 + $0x20] sm:$0xf]
  %v1017 = vld [vmem:[%s5 + $0x24] sm:$0xf]
  %v1018 = vld [vmem:[%s5 + $0x28] sm:$0xf]
  %v1019 = vld [vmem:[%s5 + $0x2c] sm:$0xf]
  %v1020 = vld [vmem:[%s5 + $0x30] sm:$0xf]
  %v1021 = vld [vmem:[%s5 + $0x34] sm:$0xf]
  %v1022 = vld [vmem:[%s5 + $0x38] sm:$0xf]
  %v1023 = vld [vmem:[%s5 + $0x3c] sm:$0xf]
  %v1040 = vunpack.c.l.b16 %v1008
  %v1041 = vunpack.c.l.b16 %v1009
  %v1042 = vunpack.c.l.b16 %v1010
  %v1043 = vunpack.c.l.b16 %v1011
  %v1044 = vunpack.c.l.b16 %v1012
  %v1045 = vunpack.c.l.b16 %v1013
  %v1046 = vunpack.c.l.b16 %v1014
  %v1047 = vunpack.c.l.b16 %v1015
  %v1048 = vunpack.c.l.b16 %v1016
  %v1049 = vunpack.c.l.b16 %v1017
  %v1050 = vunpack.c.l.b16 %v1018
  %v1051 = vunpack.c.l.b16 %v1019
  %v1052 = vunpack.c.l.b16 %v1020
  %v1053 = vunpack.c.l.b16 %v1021
  %v1054 = vunpack.c.l.b16 %v1022
  %v1055 = vunpack.c.l.b16 %v1023
  %v1056 = vpack.c.b16 %v1041, %v1040
  %v1057 = vpack.c.b16 %v1043, %v1042
  %v1058 = vpack.c.b16 %v1045, %v1044
  %v1059 = vpack.c.b16 %v1047, %v1046
  %v1060 = vpack.c.b16 %v1049, %v1048
  %v1061 = vpack.c.b16 %v1051, %v1050
  %v1062 = vpack.c.b16 %v1053, %v1052
  %v1063 = vpack.c.b16 %v1055, %v1054
  %1072 = vmatprep.subr.bf16.mxu0 0
  %1073 = vmatpush1.bf16.msra.mxu0 %v1056
  %1074 = vmatprep.subr.bf16.mxu0 0
  %1075 = vmatpush1.bf16.msra.mxu0 %v1057
  %1076 = vmatprep.subr.bf16.mxu0 0
  %1077 = vmatpush1.bf16.msra.mxu0 %v1058
  %1078 = vmatprep.subr.bf16.mxu0 0
  %1079 = vmatpush1.bf16.msra.mxu0 %v1059
  %1080 = vmatprep.subr.bf16.mxu0 0
  %1081 = vmatpush1.bf16.msra.mxu0 %v1060
  %1082 = vmatprep.subr.bf16.mxu0 0
  %1083 = vmatpush1.bf16.msra.mxu0 %v1061
  %1084 = vmatprep.subr.bf16.mxu0 0
  %1085 = vmatpush1.bf16.msra.mxu0 %v1062
  %1086 = vmatprep.subr.bf16.mxu0 0
  %1087 = vmatpush1.bf16.msra.mxu0 %v1063
  %1088 = vmatprep.subr.bf16.mxu0 0
  %1089 = vmatpush1.bf16.msra.mxu0 0
  %1090 = vmatprep.subr.bf16.mxu0 0
  %1091 = vmatpush1.bf16.msra.mxu0 0
  %1092 = vmatprep.subr.bf16.mxu0 0
  %1093 = vmatpush1.bf16.msra.mxu0 0
  %1094 = vmatprep.subr.bf16.mxu0 0
  %1095 = vmatpush1.bf16.msra.mxu0 0
  %1096 = vmatprep.subr.bf16.mxu0 0
  %1097 = vmatpush1.bf16.msra.mxu0 0
  %1098 = vmatprep.subr.bf16.mxu0 0
  %1099 = vmatpush1.bf16.msra.mxu0 0
  %1100 = vmatprep.subr.bf16.mxu0 0
  %1101 = vmatpush1.bf16.msra.mxu0 0
  %1102 = vmatprep.subr.bf16.mxu0 0
  %1103 = vmatpush1.bf16.msra.mxu0 0
  %1104 = vmatprep.mubr.bf16.mxu0 0
  %1105 = vmatmul.mubr.bf16.gmra.mrb[0].mxu0 %v1000
  %v1106 = vpop.f32.mrb[0].mxu0
  %v1107 = vadd.f32 0.0, %v1106
  %v1108 = vpop.f32.mrb[0].mxu0
  %v1109 = vpop.f32.mrb[0].mxu0
  %v1110 = vadd.f32 0.0, %v1109
  %v1111 = vpop.f32.mrb[0].mxu0
  %1112 = vmatprep.mubr.bf16.mxu0 0
  %1113 = vmatmul.mubr.bf16.gmra.mrb[0].mxu0 %v1001
  %v1114 = vpop.f32.mrb[0].mxu0
  %v1115 = vadd.f32 0.0, %v1114
  %v1116 = vpop.f32.mrb[0].mxu0
  %v1117 = vpop.f32.mrb[0].mxu0
  %v1118 = vadd.f32 0.0, %v1117
  %v1119 = vpop.f32.mrb[0].mxu0
  %1120 = vmatprep.mubr.bf16.mxu0 0
  %1121 = vmatmul.mubr.bf16.gmra.mrb[0].mxu0 %v1002
  %v1122 = vpop.f32.mrb[0].mxu0
  %v1123 = vadd.f32 0.0, %v1122
  %v1124 = vpop.f32.mrb[0].mxu0
  %v1125 = vpop.f32.mrb[0].mxu0
  %v1126 = vadd.f32 0.0, %v1125
  %v1127 = vpop.f32.mrb[0].mxu0
  %1128 = vmatprep.mubr.bf16.mxu0 0
  %1129 = vmatmul.mubr.bf16.gmra.mrb[0].mxu0 %v1003
  %v1130 = vpop.f32.mrb[0].mxu0
  %v1131 = vadd.f32 0.0, %v1130
  %v1132 = vpop.f32.mrb[0].mxu0
  %v1133 = vpop.f32.mrb[0].mxu0
  %v1134 = vadd.f32 0.0, %v1133
  %v1135 = vpop.f32.mrb[0].mxu0
  %1136 = vmatprep.mubr.bf16.mxu0 0
  %1137 = vmatmul.mubr.bf16.gmra.mrb[0].mxu0 %v1004
  %v1138 = vpop.f32.mrb[0].mxu0
  %v1139 = vadd.f32 0.0, %v1138
  %v1140 = vpop.f32.mrb[0].mxu0
  %v1141 = vpop.f32.mrb[0].mxu0
  %v1142 = vadd.f32 0.0, %v1141
  %v1143 = vpop.f32.mrb[0].mxu0
  %1144 = vmatprep.mubr.bf16.mxu0 0
  %1145 = vmatmul.mubr.bf16.gmra.mrb[0].mxu0 %v1005
  %v1146 = vpop.f32.mrb[0].mxu0
  %v1147 = vadd.f32 0.0, %v1146
  %v1148 = vpop.f32.mrb[0].mxu0
  %v1149 = vpop.f32.mrb[0].mxu0
  %v1150 = vadd.f32 0.0, %v1149
  %v1151 = vpop.f32.mrb[0].mxu0
  %1152 = vmatprep.mubr.bf16.mxu0 0
  %1153 = vmatmul.mubr.bf16.gmra.mrb[0].mxu0 %v1006
  %v1154 = vpop.f32.mrb[0].mxu0
  %v1155 = vadd.f32 0.0, %v1154
  %v1156 = vpop.f32.mrb[0].mxu0
  %v1157 = vpop.f32.mrb[0].mxu0
  %v1158 = vadd.f32 0.0, %v1157
  %v1159 = vpop.f32.mrb[0].mxu0
  %1160 = vmatprep.mubr.bf16.mxu0 0
  %1161 = vmatmul.mubr.bf16.gmra.mrb[0].mxu0 %v1007
  %v1162 = vpop.f32.mrb[0].mxu0
  %v1163 = vadd.f32 0.0, %v1162
  %v1164 = vpop.f32.mrb[0].mxu0
  %v1165 = vpop.f32.mrb[0].mxu0
  %v1166 = vadd.f32 0.0, %v1165
  %v1167 = vpop.f32.mrb[0].mxu0
  %1168 = vdwg.mxu0
  %v1169 = vpack.c.bf16 %v1110, %v1107
  %v1170 = vpack.c.bf16 %v1118, %v1115
  %v1171 = vpack.c.bf16 %v1126, %v1123
  %v1172 = vpack.c.bf16 %v1134, %v1131
  %v1173 = vpack.c.bf16 %v1142, %v1139
  %v1174 = vpack.c.bf16 %v1150, %v1147
  %v1175 = vpack.c.bf16 %v1158, %v1155
  %v1176 = vpack.c.bf16 %v1166, %v1163
  %1177 = vmatprep.subr.bf16.mxu0 0
  %1178 = vmatpush1.bf16.msra.mxu0 %v1169
  %1179 = vmatprep.subr.bf16.mxu0 0
  %1180 = vmatpush1.bf16.msra.mxu0 %v1170
  %1181 = vmatprep.subr.bf16.mxu0 0
  %1182 = vmatpush1.bf16.msra.mxu0 %v1171
  %1183 = vmatprep.subr.bf16.mxu0 0
  %1184 = vmatpush1.bf16.msra.mxu0 %v1172
  %1185 = vmatprep.subr.bf16.mxu0 0
  %1186 = vmatpush1.bf16.msra.mxu0 %v1173
  %1187 = vmatprep.subr.bf16.mxu0 0
  %1188 = vmatpush1.bf16.msra.mxu0 %v1174
  %1189 = vmatprep.subr.bf16.mxu0 0
  %1190 = vmatpush1.bf16.msra.mxu0 %v1175
  %1191 = vmatprep.subr.bf16.mxu0 0
  %1192 = vmatpush1.bf16.msra.mxu0 %v1176
  %1193 = vmatprep.subr.bf16.mxu0 0
  %1194 = vmatpush1.bf16.msra.mxu0 0
  %1195 = vmatprep.subr.bf16.mxu0 0
  %1196 = vmatpush1.bf16.msra.mxu0 0
  %1197 = vmatprep.subr.bf16.mxu0 0
  %1198 = vmatpush1.bf16.msra.mxu0 0
  %1199 = vmatprep.subr.bf16.mxu0 0
  %1200 = vmatpush1.bf16.msra.mxu0 0
  %1201 = vmatprep.subr.bf16.mxu0 0
  %1202 = vmatpush1.bf16.msra.mxu0 0
  %1203 = vmatprep.subr.bf16.mxu0 0
  %1204 = vmatpush1.bf16.msra.mxu0 0
  %1205 = vmatprep.subr.bf16.mxu0 0
  %1206 = vmatpush1.bf16.msra.mxu0 0
  %1207 = vmatprep.subr.bf16.mxu0 0
  %1208 = vmatpush1.bf16.msra.mxu0 0
  %1209 = vmatprep.mubr.bf16.mxu0 0
  %1210 = vmatmul.mubr.bf16.gmra.mrb[0].mxu0 %v307
  %v1211 = vpop.f32.mrb[0].mxu0
  %v1212 = vadd.f32 0.0, %v1211
  %v1213 = vpop.f32.mrb[0].mxu0
  %v1214 = vpop.f32.mrb[0].mxu0
  %v1215 = vadd.f32 0.0, %v1214
  %v1216 = vpop.f32.mrb[0].mxu0
  %1217 = vmatprep.mubr.bf16.mxu0 0
  %1218 = vmatmul.mubr.bf16.gmra.mrb[0].mxu0 %v308
  %v1219 = vpop.f32.mrb[0].mxu0
  %v1220 = vadd.f32 0.0, %v1219
  %v1221 = vpop.f32.mrb[0].mxu0
  %v1222 = vpop.f32.mrb[0].mxu0
  %v1223 = vadd.f32 0.0, %v1222
  %v1224 = vpop.f32.mrb[0].mxu0
  %1225 = vmatprep.mubr.bf16.mxu0 0
  %1226 = vmatmul.mubr.bf16.gmra.mrb[0].mxu0 %v309
  %v1227 = vpop.f32.mrb[0].mxu0
  %v1228 = vadd.f32 0.0, %v1227
  %v1229 = vpop.f32.mrb[0].mxu0
  %v1230 = vpop.f32.mrb[0].mxu0
  %v1231 = vadd.f32 0.0, %v1230
  %v1232 = vpop.f32.mrb[0].mxu0
  %1233 = vmatprep.mubr.bf16.mxu0 0
  %1234 = vmatmul.mubr.bf16.gmra.mrb[0].mxu0 %v310
  %v1235 = vpop.f32.mrb[0].mxu0
  %v1236 = vadd.f32 0.0, %v1235
  %v1237 = vpop.f32.mrb[0].mxu0
  %v1238 = vpop.f32.mrb[0].mxu0
  %v1239 = vadd.f32 0.0, %v1238
  %v1240 = vpop.f32.mrb[0].mxu0
  %1241 = vmatprep.mubr.bf16.mxu0 0
  %1242 = vmatmul.mubr.bf16.gmra.mrb[0].mxu0 %v311
  %v1243 = vpop.f32.mrb[0].mxu0
  %v1244 = vadd.f32 0.0, %v1243
  %v1245 = vpop.f32.mrb[0].mxu0
  %v1246 = vpop.f32.mrb[0].mxu0
  %v1247 = vadd.f32 0.0, %v1246
  %v1248 = vpop.f32.mrb[0].mxu0
  %1249 = vmatprep.mubr.bf16.mxu0 0
  %1250 = vmatmul.mubr.bf16.gmra.mrb[0].mxu0 %v312
  %v1251 = vpop.f32.mrb[0].mxu0
  %v1252 = vadd.f32 0.0, %v1251
  %v1253 = vpop.f32.mrb[0].mxu0
  %v1254 = vpop.f32.mrb[0].mxu0
  %v1255 = vadd.f32 0.0, %v1254
  %v1256 = vpop.f32.mrb[0].mxu0
  %1257 = vmatprep.mubr.bf16.mxu0 0
  %1258 = vmatmul.mubr.bf16.gmra.mrb[0].mxu0 %v313
  %v1259 = vpop.f32.mrb[0].mxu0
  %v1260 = vadd.f32 0.0, %v1259
  %v1261 = vpop.f32.mrb[0].mxu0
  %v1262 = vpop.f32.mrb[0].mxu0
  %v1263 = vadd.f32 0.0, %v1262
  %v1264 = vpop.f32.mrb[0].mxu0
  %1265 = vmatprep.mubr.bf16.mxu0 0
  %1266 = vmatmul.mubr.bf16.gmra.mrb[0].mxu0 %v314
  %v1267 = vpop.f32.mrb[0].mxu0
  %v1268 = vadd.f32 0.0, %v1267
  %v1269 = vpop.f32.mrb[0].mxu0
  %v1270 = vpop.f32.mrb[0].mxu0
  %v1271 = vadd.f32 0.0, %v1270
  %v1272 = vpop.f32.mrb[0].mxu0
  %1273 = vdwg.mxu0
  %1274 = vst [vmem:[%s6] sm:$0xff] %v1212
  %1275 = vst [vmem:[%s6 + $0x8] sm:$0xff] %v1215
  %1276 = vst [vmem:[%s6 + $0x10] sm:$0xff] %v1220
  %1277 = vst [vmem:[%s6 + $0x18] sm:$0xff] %v1223
  %1278 = vst [vmem:[%s6 + $0x20] sm:$0xff] %v1228
  %1279 = vst [vmem:[%s6 + $0x28] sm:$0xff] %v1231
  %1280 = vst [vmem:[%s6 + $0x30] sm:$0xff] %v1236
  %1281 = vst [vmem:[%s6 + $0x38] sm:$0xff] %v1239
  %1282 = vst [vmem:[%s6 + $0x40] sm:$0xff] %v1244
  %1283 = vst [vmem:[%s6 + $0x48] sm:$0xff] %v1247
  %1284 = vst [vmem:[%s6 + $0x50] sm:$0xff] %v1252
  %1285 = vst [vmem:[%s6 + $0x58] sm:$0xff] %v1255
  %1286 = vst [vmem:[%s6 + $0x60] sm:$0xff] %v1260
  %1287 = vst [vmem:[%s6 + $0x68] sm:$0xff] %v1263
  %1288 = vst [vmem:[%s6 + $0x70] sm:$0xff] %v1268
  %1289 = vst [vmem:[%s6 + $0x78] sm:$0xff] %v1271
  %1290 = vst [vmem:[%s7] sm:$0xff] %v648
  %1291 = vst [vmem:[%s7 + $0x8] sm:$0xff] %v651
  %1292 = vst [vmem:[%s7 + $0x10] sm:$0xff] %v656
  %1293 = vst [vmem:[%s7 + $0x18] sm:$0xff] %v659
  %1294 = vst [vmem:[%s7 + $0x20] sm:$0xff] %v664
  %1295 = vst [vmem:[%s7 + $0x28] sm:$0xff] %v667
  %1296 = vst [vmem:[%s7 + $0x30] sm:$0xff] %v672
  %1297 = vst [vmem:[%s7 + $0x38] sm:$0xff] %v675
  %1298 = vst [vmem:[%s7 + $0x40] sm:$0xff] %v680
  %1299 = vst [vmem:[%s7 + $0x48] sm:$0xff] %v683
  %1300 = vst [vmem:[%s7 + $0x50] sm:$0xff] %v688
  %1301 = vst [vmem:[%s7 + $0x58] sm:$0xff] %v691
  %1302 = vst [vmem:[%s7 + $0x60] sm:$0xff] %v696
  %1303 = vst [vmem:[%s7 + $0x68] sm:$0xff] %v699
  %1304 = vst [vmem:[%s7 + $0x70] sm:$0xff] %v704
  %1305 = vst [vmem:[%s7 + $0x78] sm:$0xff] %v707
  // Predicated region
  $region26: #{gcnae_forward.1} parent=0 // pred_check
    _
  $region27: #{gcnae_forward.1} parent=0 // pred_check_branch
    %1307 = sbr.rel (0) target = $region29
  $region28: #{gcnae_forward.1} parent=0 // pred_region
    _
  $region29: #{gcnae_forward.1} parent=0 // pred_fallthru
    _
  // Predicated region
  $region30: #{gcnae_forward.1} parent=0 // pred_check
    _
  $region31: #{gcnae_forward.1} parent=0 // pred_check_branch
    %1309 = sbr.rel (0) target = $region33
  $region32: #{gcnae_forward.1} parent=0 // pred_region
    _
  $region33: #{gcnae_forward.1} parent=0 // pred_fallthru
    _
  // Predicated region
  $region34: #{gcnae_forward.1} parent=0 // pred_check
    _
  $region35: #{gcnae_forward.1} parent=0 // pred_check_branch
    %1311 = sbr.rel (0) target = $region37
  $region36: #{gcnae_forward.1} parent=0 // pred_region
    _
  $region37: #{gcnae_forward.1} parent=0 // pred_fallthru
    _
  // Predicated region
  $region38: #{gcnae_forward.1} parent=0 // pred_check
    _
  $region39: #{gcnae_forward.1} parent=0 // pred_check_branch
    %1313 = sbr.rel (0) target = $region41
  $region40: #{gcnae_forward.1} parent=0 // pred_region
    _
  $region41: #{gcnae_forward.1} parent=0 // pred_fallthru
    _

</llo_original>
